<compile_context>
chip_gen: v7x
topology: tpu7x:2x2x1
jax: 0.10.0
libtpu: 0.0.40
codegen_flags: <defaults>
</compile_context>

<pallas_src>
import jax
import jax.numpy as jnp
from jax.experimental import pallas as pl
from jax.experimental.pallas import tpu as pltpu


# ------------------------------ tile selection -------------------------------

def _round_up(x, m):
    return ((x + m - 1) // m) * m


def _vmem_budget_bytes():
    """Physical VMEM per TensorCore; falls back to 64 MiB (v7x) if unknown."""
    try:
        info = pltpu.get_tpu_info()
        cap = int(getattr(info, "vmem_capacity_bytes", 0))
        if cap > 0:
            return cap
    except Exception:
        pass
    return 64 * 1024 * 1024


def _select_tiles(M, K, N, in_sz, w_sz, out_sz, has_bias, budget):
    """Pick (tm, tn, tk, K_padded, vmem_estimate) keeping double-buffered
    blocks + the f32 accumulator within ~70% of the per-core VMEM budget."""
    limit = 0.70 * budget

    def est(tm, tn, tk):
        e = (2 * tm * tk * in_sz        # x blocks (double-buffered)
             + 2 * tk * tn * w_sz       # weight blocks (double-buffered)
             + 2 * tm * tn * out_sz     # output blocks (double-buffered)
             + tm * tn * 4)             # f32 accumulator scratch
        if has_bias:
            e += 2 * tn * w_sz
        return e

    # Large output tiles for arithmetic intensity.
    tm = min(512, _round_up(M, 8))
    tn = N if N <= 512 else 512

    # v7x megacore: guarantee >= 2 tiles along the "parallel" grid axes.
    if pl.cdiv(M, tm) * pl.cdiv(N, tn) < 2:
        if N >= 256:
            tn = _round_up(pl.cdiv(N, 2), 128)
        elif M >= 16:
            tm = _round_up(pl.cdiv(M, 2), 8)

    # Safety: shrink output tile if even a minimal K tile would not fit.
    while est(tm, tn, 128) > limit and (tm > 8 or tn > 128):
        if tn > 128:
            tn = max(128, tn // 2)
        else:
            tm = max(8, tm // 2)

    # Reduction tile: as large as the budget allows (amortizes acc RMW).
    tk_cap = 2048
    while tk_cap > 128 and est(tm, tn, tk_cap) > limit:
        tk_cap //= 2

    if K <= tk_cap:
        tk, k_pad = K, K                       # single full-K block
    else:
        tk = None
        for cand in range((tk_cap // 128) * 128, 511, -128):
            if K % cand == 0:                  # exact divisor: no padding
                tk = cand
                break
        if tk is not None:
            k_pad = K
        else:
            tk = min(tk_cap, 512)              # pad K once in the wrapper
            k_pad = _round_up(K, tk)

    return tm, tn, tk, k_pad, est(tm, tn, tk)


# ---------------------------------- kernels ----------------------------------

def _linear_bias_kernel(x_ref, w_ref, b_ref, o_ref, acc_ref):
    # x_ref: (tm, tk)  w_ref: (tk, tn)  b_ref: (1, tn)  o_ref: (tm, tn)
    k = pl.program_id(2)

    @pl.when(k == 0)
    def _():
        # Fold bias into the accumulator init (no finalize-path add needed).
        acc_ref[...] = jnp.broadcast_to(
            b_ref[...].astype(jnp.float32), acc_ref.shape)

    acc_ref[...] += jnp.dot(x_ref[...], w_ref[...],
                            preferred_element_type=jnp.float32)

    @pl.when(k == pl.num_programs(2) - 1)
    def _():
        o_ref[...] = acc_ref[...].astype(o_ref.dtype)


def _linear_nobias_kernel(x_ref, w_ref, o_ref, acc_ref):
    k = pl.program_id(2)

    @pl.when(k == 0)
    def _():
        acc_ref[...] = jnp.zeros_like(acc_ref)

    acc_ref[...] += jnp.dot(x_ref[...], w_ref[...],
                            preferred_element_type=jnp.float32)

    @pl.when(k == pl.num_programs(2) - 1)
    def _():
        o_ref[...] = acc_ref[...].astype(o_ref.dtype)


# ---------------------------------- wrapper -----------------------------------

def prepare_weight_t(weight):
    """One-time (in_features, out_features) copy of the PyTorch-layout weight.
    Do this at init so no per-call transpose (HBM pass) is needed."""
    return jnp.asarray(weight).T


def linear_forward(x, weight=None, bias=None, *, weight_t=None):
    """
    x:        (*, in_features)
    weight:   (out_features, in_features)     -- PyTorch layout
    bias:     (out_features,) or None
    weight_t: optional pre-transposed (in_features, out_features) copy;
              pass it to avoid the per-call transpose.
    returns   (*, out_features)
    """
    if weight_t is None:
        assert weight is not None
        weight_t = prepare_weight_t(weight)
    K, N = weight_t.shape
    assert x.shape[-1] == K

    lead_shape = x.shape[:-1]
    x2d = x.reshape(-1, K)
    M = x2d.shape[0]
    if M == 0:
        return jnp.zeros((*lead_shape, N), dtype=x.dtype)

    in_sz = jnp.dtype(x.dtype).itemsize
    w_sz = jnp.dtype(weight_t.dtype).itemsize
    out_sz = in_sz
    budget = _vmem_budget_bytes()
    tm, tn, tk, k_pad, vmem_est = _select_tiles(
        M, K, N, in_sz, w_sz, out_sz, bias is not None, budget)

    if k_pad != K:
        # Zero-pad the reduction dim once (zeros contribute nothing) so tk
        # never silently becomes a huge full-K block.
        x2d = jnp.pad(x2d, ((0, 0), (0, k_pad - K)))
        weight_t = jnp.pad(weight_t, ((0, k_pad - K), (0, 0)))

    grid_m, grid_n, grid_k = pl.cdiv(M, tm), pl.cdiv(N, tn), k_pad // tk
    grid = (grid_m, grid_n, grid_k)

    x_spec = pl.BlockSpec((tm, tk), lambda i, j, k: (i, k))
    w_spec = pl.BlockSpec((tk, tn), lambda i, j, k: (k, j))
    o_spec = pl.BlockSpec((tm, tn), lambda i, j, k: (i, j))
    out_shape = jax.ShapeDtypeStruct((M, N), x.dtype)
    scratch = [pltpu.VMEM((tm, tn), jnp.float32)]

    # Actual HBM traffic: x is streamed grid_n times, weight grid_m times.
    bytes_accessed = (M * k_pad * grid_n * in_sz
                      + k_pad * N * grid_m * w_sz
                      + M * N * out_sz)
    if bias is not None:
        bytes_accessed += N * jnp.dtype(bias.dtype).itemsize
    cost = pl.CostEstimate(flops=2 * M * k_pad * N, transcendentals=0,
                           bytes_accessed=int(bytes_accessed))

    vmem_limit = int(min(0.9 * budget, max(1.3 * vmem_est, 32 * 1024 * 1024)))
    cp = pltpu.CompilerParams(
        dimension_semantics=("parallel", "parallel", "arbitrary"),
        vmem_limit_bytes=vmem_limit)

    if bias is not None:
        b2d = bias.reshape(1, N)
        b_spec = pl.BlockSpec((1, tn), lambda i, j, k: (0, j))
        out2d = pl.pallas_call(
            _linear_bias_kernel,
            out_shape=out_shape,
            grid_spec=pltpu.PrefetchScalarGridSpec(
                num_scalar_prefetch=0,
                grid=grid,
                in_specs=[x_spec, w_spec, b_spec],
                out_specs=o_spec,
                scratch_shapes=scratch),
            compiler_params=cp,
            cost_estimate=cost,
        )(x2d, weight_t, b2d)
    else:
        out2d = pl.pallas_call(
            _linear_nobias_kernel,
            out_shape=out_shape,
            grid_spec=pltpu.PrefetchScalarGridSpec(
                num_scalar_prefetch=0,
                grid=grid,
                in_specs=[x_spec, w_spec],
                out_specs=o_spec,
                scratch_shapes=scratch),
            compiler_params=cp,
            cost_estimate=cost,
        )(x2d, weight_t)

    return out2d.reshape(*lead_shape, N)


def init_linear_params(key, in_features, out_features, bias=True,
                       dtype=jnp.float32):
    """Matches PyTorch init: uniform(-1/sqrt(in), +1/sqrt(in))."""
    kw, kb = jax.random.split(key)
    bound = 1.0 / (in_features ** 0.5)
    weight = jax.random.uniform(kw, (out_features, in_features), dtype,
                                minval=-bound, maxval=bound)
    b = (jax.random.uniform(kb, (out_features,), dtype,
                            minval=-bound, maxval=bound) if bias else None)
    return weight, b


if __name__ == "__main__":
    key = jax.random.PRNGKey(0)
    k_x, k_p = jax.random.split(key)

    batch, seq, in_features, out_features = 2, 8, 32, 64
    x = jax.random.normal(k_x, (batch, seq, in_features), dtype=jnp.float32)
    weight, bias = init_linear_params(k_p, in_features, out_features, bias=True)
    weight_t = prepare_weight_t(weight)   # one-time transposed copy (static)

    # Bias path (pre-transposed weight, the recommended calling convention).
    y = jax.block_until_ready(linear_forward(x, weight, bias, weight_t=weight_t))
    y_ref = jnp.einsum('oi,bsi->bso', weight, x) + bias
    assert y.shape == (batch, seq, out_features)
    assert jnp.allclose(y, y_ref, atol=1e-5, rtol=1e-5)

    # No-bias path (per-call transpose convenience path).
    y2 = jax.block_until_ready(linear_forward(x, weight, None))
    y2_ref = jnp.einsum('oi,bsi->bso', weight, x)
    assert jnp.allclose(y2, y2_ref, atol=1e-5, rtol=1e-5)

    print("KERNEL_OK")
</pallas_src>

<mosaic_0001>
module attributes {stable_mosaic.version = 11 : i64} {
  func.func @_linear_bias_kernel(%arg0: i32, %arg1: i32, %arg2: i32, %arg3: memref<8x32xf32, #tpu.memory_space<vmem>>, %arg4: memref<32x64xf32, #tpu.memory_space<vmem>>, %arg5: memref<1x64xf32, #tpu.memory_space<vmem>>, %arg6: memref<8x64xf32, #tpu.memory_space<vmem>>, %arg7: memref<8x64xf32, #tpu.memory_space<vmem>>) attributes {dimension_semantics = [#tpu.dimension_semantics<parallel>, #tpu.dimension_semantics<parallel>, #tpu.dimension_semantics<arbitrary>], iteration_bounds = array<i64: 2, 1, 1>, scalar_prefetch = 0 : i64, scratch_operands = 1 : i64, tpu.core_type = #tpu.core_type<tc>, window_params = [{transform_indices = @transform_0, window_bounds = array<i64: 8, 32>}, {transform_indices = @transform_1, window_bounds = array<i64: 32, 64>}, {transform_indices = @transform_2, window_bounds = array<i64: 1, 64>}, {transform_indices = @transform_3, window_bounds = array<i64: 8, 64>}]} {
    %c0_i32 = arith.constant 0 : i32
    %0 = arith.cmpi eq, %arg2, %c0_i32 : i32
    %1 = arith.extui %0 : i1 to i32
    %c0_i32_0 = arith.constant 0 : i32
    %2 = arith.cmpi ne, %1, %c0_i32_0 : i32
    scf.if %2 {
      %c0_10 = arith.constant 0 : index
      %c0_11 = arith.constant 0 : index
      %12 = vector.load %arg5[%c0_10, %c0_11] : memref<1x64xf32, #tpu.memory_space<vmem>>, vector<1x64xf32>
      %13 = vector.shape_cast %12 : vector<1x64xf32> to vector<1x64xf32>
      %14 = vector.broadcast %13 : vector<1x64xf32> to vector<8x64xf32>
      %c0_12 = arith.constant 0 : index
      %c0_13 = arith.constant 0 : index
      %15 = vector.load %arg7[%c0_12, %c0_13] : memref<8x64xf32, #tpu.memory_space<vmem>>, vector<8x64xf32>
      tpu.vector_store %arg7[%c0_12, %c0_13], %14 {strides = array<i32>} : memref<8x64xf32, #tpu.memory_space<vmem>>, vector<8x64xf32>,
    } else {
    }
    %c0 = arith.constant 0 : index
    %c0_1 = arith.constant 0 : index
    %3 = vector.load %arg7[%c0, %c0_1] : memref<8x64xf32, #tpu.memory_space<vmem>>, vector<8x64xf32>
    %c0_2 = arith.constant 0 : index
    %c0_3 = arith.constant 0 : index
    %4 = vector.load %arg3[%c0_2, %c0_3] : memref<8x32xf32, #tpu.memory_space<vmem>>, vector<8x32xf32>
    %c0_4 = arith.constant 0 : index
    %c0_5 = arith.constant 0 : index
    %5 = vector.load %arg4[%c0_4, %c0_5] : memref<32x64xf32, #tpu.memory_space<vmem>>, vector<32x64xf32>
    %cst = arith.constant dense<0.000000e+00> : vector<8x64xf32>
    %6 = tpu.matmul %4, %5, %cst {dimension_numbers = #tpu.dot_dimension_numbers<[1], [0], [0], [1], [0, 0, 1, 1], [], []>} : vector<8x32xf32>, vector<32x64xf32>, vector<8x64xf32> -> vector<8x64xf32>
    %7 = arith.addf %3, %6 : vector<8x64xf32>
    %c0_6 = arith.constant 0 : index
    %c0_7 = arith.constant 0 : index
    %8 = vector.load %arg7[%c0_6, %c0_7] : memref<8x64xf32, #tpu.memory_space<vmem>>, vector<8x64xf32>
    tpu.vector_store %arg7[%c0_6, %c0_7], %7 {strides = array<i32>} : memref<8x64xf32, #tpu.memory_space<vmem>>, vector<8x64xf32>,
    %c0_i32_8 = arith.constant 0 : i32
    %9 = arith.cmpi eq, %arg2, %c0_i32_8 : i32
    %10 = arith.extui %9 : i1 to i32
    %c0_i32_9 = arith.constant 0 : i32
    %11 = arith.cmpi ne, %10, %c0_i32_9 : i32
    scf.if %11 {
      %c0_10 = arith.constant 0 : index
      %c0_11 = arith.constant 0 : index
      %12 = vector.load %arg7[%c0_10, %c0_11] : memref<8x64xf32, #tpu.memory_space<vmem>>, vector<8x64xf32>
      %c0_12 = arith.constant 0 : index
      %c0_13 = arith.constant 0 : index
      %13 = vector.load %arg6[%c0_12, %c0_13] : memref<8x64xf32, #tpu.memory_space<vmem>>, vector<8x64xf32>
      tpu.vector_store %arg6[%c0_12, %c0_13], %12 {strides = array<i32>} : memref<8x64xf32, #tpu.memory_space<vmem>>, vector<8x64xf32>,
    } else {
    }
    return
  }
  func.func @transform_0(%arg0: i32, %arg1: i32, %arg2: i32) -> (i32, i32) {
    %c0_i32 = arith.constant 0 : i32
    return %arg0, %arg2 : i32, i32
  }
  func.func @transform_1(%arg0: i32, %arg1: i32, %arg2: i32) -> (i32, i32) {
    %c0_i32 = arith.constant 0 : i32
    return %arg2, %arg1 : i32, i32
  }
  func.func @transform_2(%arg0: i32, %arg1: i32, %arg2: i32) -> (i32, i32) {
    %c0_i32 = arith.constant 0 : i32
    %c0_i32_0 = arith.constant 0 : i32
    return %c0_i32, %arg1 : i32, i32
  }
  func.func @transform_3(%arg0: i32, %arg1: i32, %arg2: i32) -> (i32, i32) {
    %c0_i32 = arith.constant 0 : i32
    return %arg0, %arg1 : i32, i32
  }
}

</mosaic_0001>

<llo_original>
// kernel: tpu_custom_call.1
$region0: #{tpu_custom_call.1}
  #allocation0 [shape = 'u32[]', space=smem, size = 0x4, offset = 0x4, fixed_abs, tag = 'smem constant byte address 0x4 - core index']
  #allocation1 [shape = 'u32[144,128]{1,0:T(1,128)}', space=vmem, size = 0x12000, scoped, tag = 'internal scratch']
  #allocation2 [shape = 'f32[8,64]{1,0:T(8,128)}', space=vmem, size = 0x1000, scoped, tag = 'scratch operand']
  %s0 = inlined_call_operand.hbm [shape: f32[16,32], index: 0, kind: input, shape index: {}]
  %s1 = inlined_call_operand.hbm [shape: f32[32,64], index: 1, kind: input, shape index: {}]
  %s2 = inlined_call_operand.vmem [shape: f32[1,64], index: 2, kind: input, shape index: {}]
  %s3 = inlined_call_operand.hbm [shape: f32[16,64], index: 3, kind: output, shape index: {}]
  %s4 = sld [smem:[#allocation0]]
  $region61: #{tpu_custom_call.1} parent=0
    _
  %s6 = ssub.s32 1, %s4
  %s7 = scalar_select 0, %s6, %s4
  $region1: #{tpu_custom_call.1} parent=0
    #allocation3 [shape = 'u8[8192]{0}', space=vmem, size = 0x2000, scoped, tag = 'input window, operand 0']
    #allocation4 [shape = 's32[2]{0}', space=sflag, size = 0x8, scoped, tag = 'scoped memory for tpu_custom_call.1']
    #allocation5 [shape = 's32[2]{0}', space=sflag, size = 0x8, scoped, tag = 'scoped memory for tpu_custom_call.1']
    #allocation6 [shape = 'u8[16384]{0}', space=vmem, size = 0x4000, scoped, tag = 'input window, operand 1, single buffered']
    #allocation7 [shape = 's32[1]{0}', space=sflag, size = 0x4, scoped, tag = 'scoped memory for tpu_custom_call.1']
    #allocation8 [shape = 'u8[8192]{0}', space=vmem, size = 0x2000, scoped, tag = 'output window, operand 0']
    %8 = vsyncpa [#allocation4], 0
    %s9 = scalar_lea.sflag [#allocation4], 1
    %10 = vsyncpa %s9, 0
    %11 = vsyncpa [#allocation7], 0
    %12 = vsyncpa [#allocation5], 0
    %s13 = scalar_lea.sflag [#allocation5], 1
    %14 = vsyncpa %s13, 0
    loop: start=0, step=1, limit=4
    $region2: #{tpu_custom_call.1} parent=1 // loop_pre_header
      _
    $region3: #{tpu_custom_call.1} parent=1 // loop_header
      %s16 = sphi 0, %s20
      %p17 = scmp.ge.s32.totalorder %s16, 4
      %s23 = sphi 0, %s42
      %s24 = sphi 0, %s38
      %s25 = sphi 0, %s34
      %s26 = sphi 0, %s23
      %s27 = sphi 0, %s24
      %s28 = sphi 0, %s25
      %s29 = sphi 0, %s26
      %s30 = sphi 0, %s27
      %s31 = sphi 0, %s28
      %s47 = sphi 0, %s49
      %s50 = sphi 0, %s47
      %s51 = sphi 0, %s50
      %s67 = sphi 0, %s51
      %s75 = sphi 0, %s77
      %s78 = sphi 0, %s75
      %s79 = sphi 0, %s78
      %s95 = sphi 0, %s79
      %s101 = sphi 0, %s103
      %s104 = sphi 0, %s101
      %s105 = sphi 0, %s104
      %s121 = sphi 0, %s105
      %s129 = sphi 0, %s131
      %s132 = sphi 0, %s129
      %s133 = sphi 0, %s132
      %s149 = sphi 0, %s133
    $region4: #{tpu_custom_call.1} parent=1 // loop_header_branch
      %19 = sbr.rel (%p17) target = $region8
    $region5: #{tpu_custom_call.1} parent=1 // loop_body
      %s21 = ssub.s32 %s16, 1
      %s22 = ssub.s32 %s16, 2
      %s32 = sadd.s32 1, %s25
      %p33 = scmp.ge.s32.totalorder %s32, 1
      %s34 = scalar_select %p33, 0, %s32
      %s35 = sadd.s32 1, %s24
      %s36 = scalar_select %p33, %s35, %s24
      %p37 = scmp.ge.s32.totalorder %s36, 1
      %s38 = scalar_select %p37, 0, %s36
      %s39 = sadd.s32 1, %s23
      %s40 = scalar_select %p37, %s39, %s23
      %p41 = scmp.ge.s32.totalorder %s40, 2
      %s42 = scalar_select %p41, 0, %s40
      %s43 = ssub.s32 %s23, %s42
      %s44 = ssub.s32 %s25, %s34
      %s45 = sor.u32 %s43, %s44
      %p46 = scmp.eq.s32.totalorder %s45, 0
      %s48 = sadd.s32 %s47, 1
      %s49 = scalar_select %p46, %s47, %s48
      %p52 = pneg %p46
      %p53 = scmp.eq.s32.totalorder %s16, 1
      %p54 = por %p52, %p53
      %p55 = scmp.ne.s32.totalorder %s47, %s50
      %p56 = scmp.eq.s32.totalorder %s16, 0
      %p57 = por %p55, %p56
      %p58 = scmp.ne.s32.totalorder %s47, %s50
      %p59 = scmp.eq.s32.totalorder %s21, 1
      %p60 = por %p58, %p59
      %p61 = scmp.ne.s32.totalorder %s50, %s51
      %p62 = scmp.eq.s32.totalorder %s21, 0
      %p63 = por %p61, %p62
      %p64 = scmp.ne.s32.totalorder %s50, %s51
      %p65 = scmp.eq.s32.totalorder %s22, 1
      %p66 = por %p64, %p65
      %p68 = scmp.ne.s32.totalorder %s51, %s67
      %p69 = scmp.eq.s32.totalorder %s22, 0
      %p70 = por %p68, %p69
      %s71 = ssub.s32 %s25, %s34
      %s72 = ssub.s32 %s24, %s38
      %s73 = sor.u32 %s71, %s72
      %p74 = scmp.eq.s32.totalorder %s73, 0
      %s76 = sadd.s32 %s75, 1
      %s77 = scalar_select %p74, %s75, %s76
      %p80 = pneg %p74
      %p81 = scmp.eq.s32.totalorder %s16, 1
      %p82 = por %p80, %p81
      %p83 = scmp.ne.s32.totalorder %s75, %s78
      %p84 = scmp.eq.s32.totalorder %s16, 0
      %p85 = por %p83, %p84
      %p86 = scmp.ne.s32.totalorder %s75, %s78
      %p87 = scmp.eq.s32.totalorder %s21, 1
      %p88 = por %p86, %p87
      %p89 = scmp.ne.s32.totalorder %s78, %s79
      %p90 = scmp.eq.s32.totalorder %s21, 0
      %p91 = por %p89, %p90
      %p92 = scmp.ne.s32.totalorder %s78, %s79
      %p93 = scmp.eq.s32.totalorder %s22, 1
      %p94 = por %p92, %p93
      %p96 = scmp.ne.s32.totalorder %s79, %s95
      %p97 = scmp.eq.s32.totalorder %s22, 0
      %p98 = por %p96, %p97
      %s99 = ssub.s32 %s24, %s38
      %p100 = scmp.eq.s32.totalorder %s99, 0
      %s102 = sadd.s32 %s101, 1
      %s103 = scalar_select %p100, %s101, %s102
      %p106 = pneg %p100
      %p107 = scmp.eq.s32.totalorder %s16, 1
      %p108 = por %p106, %p107
      %p109 = scmp.ne.s32.totalorder %s101, %s104
      %p110 = scmp.eq.s32.totalorder %s16, 0
      %p111 = por %p109, %p110
      %p112 = scmp.ne.s32.totalorder %s101, %s104
      %p113 = scmp.eq.s32.totalorder %s21, 1
      %p114 = por %p112, %p113
      %p115 = scmp.ne.s32.totalorder %s104, %s105
      %p116 = scmp.eq.s32.totalorder %s21, 0
      %p117 = por %p115, %p116
      %p118 = scmp.ne.s32.totalorder %s104, %s105
      %p119 = scmp.eq.s32.totalorder %s22, 1
      %p120 = por %p118, %p119
      %p122 = scmp.ne.s32.totalorder %s105, %s121
      %p123 = scmp.eq.s32.totalorder %s22, 0
      %p124 = por %p122, %p123
      %s125 = ssub.s32 %s23, %s42
      %s126 = ssub.s32 %s24, %s38
      %s127 = sor.u32 %s125, %s126
      %p128 = scmp.eq.s32.totalorder %s127, 0
      %s130 = sadd.s32 %s129, 1
      %s131 = scalar_select %p128, %s129, %s130
      %p134 = pneg %p128
      %p135 = scmp.eq.s32.totalorder %s16, 1
      %p136 = por %p134, %p135
      %p137 = scmp.ne.s32.totalorder %s129, %s132
      %p138 = scmp.eq.s32.totalorder %s16, 0
      %p139 = por %p137, %p138
      %p140 = scmp.ne.s32.totalorder %s129, %s132
      %p141 = scmp.eq.s32.totalorder %s21, 1
      %p142 = por %p140, %p141
      %p143 = scmp.ne.s32.totalorder %s132, %s133
      %p144 = scmp.eq.s32.totalorder %s21, 0
      %p145 = por %p143, %p144
      %p146 = scmp.ne.s32.totalorder %s132, %s133
      %p147 = scmp.eq.s32.totalorder %s22, 1
      %p148 = por %p146, %p147
      %p150 = scmp.ne.s32.totalorder %s133, %s149
      %p151 = scmp.eq.s32.totalorder %s22, 0
      %p152 = por %p150, %p151
      %p153 = scmp.le.s32.totalorder 1, %s16
      %p154 = scmp.lt.s32.totalorder %s16, 3
      %p155 = pnand %p153, %p154
      %p156 = pneg %p155
      // Predicated region
      $region9: #{tpu_custom_call.1} parent=5 // pred_check
        _
      $region10: #{tpu_custom_call.1} parent=5 // pred_check_branch
        %158 = sbr.rel (%p155) target = $region12
      $region11: #{tpu_custom_call.1} parent=5 // pred_region
        %s159 = ssub.s32 %s16, 1
        // Predicated region
        $region13: #{tpu_custom_call.1} parent=11 // pred_check
          %p160 = pneg %p91
        $region14: #{tpu_custom_call.1} parent=11 // pred_check_branch
          %162 = sbr.rel (%p160) target = $region16
        $region15: #{tpu_custom_call.1} parent=11 // pred_region
          %s163 = smul.u32 4, %s28
          %s165 = ssub.s32 512, 512
          %166 = vsyncadd [#allocation7], %s165
          %s167 = sadd.s32 %s27, %s163
          %s168 = smul.addr %s167, 128
          %s169 = scalar_lea.hbm %s1, %s168
          %s170 = sshll.u32 [#allocation6], 4
          %s171 = int_to_ptr.vmem [resolvable:$true] %s170
          %176 = dma.hbm_to_vmem [thread:$0]  %s169, 512, %s171, [#allocation7], 128, 128, 8
        $region16: #{tpu_custom_call.1} parent=11 // pred_fallthru
          _
        // Predicated region
        $region17: #{tpu_custom_call.1} parent=11 // pred_check
          %p177 = pneg %p117
        $region18: #{tpu_custom_call.1} parent=11 // pred_check_branch
          %179 = sbr.rel (%p177) target = $region20
        $region19: #{tpu_custom_call.1} parent=11 // pred_region
          %p180 = scmp.lt.s32.totalorder %s27, 0
          %s181 = scalar_select %p180, %s27, 0
          %s182 = scalar_lea.vmem %s2, %s181
        $region20: #{tpu_custom_call.1} parent=11 // pred_fallthru
          _
      $region12: #{tpu_custom_call.1} parent=5 // pred_fallthru
        _
      %p183 = scmp.lt.s32.totalorder %s16, 2
      // Predicated region
      $region21: #{tpu_custom_call.1} parent=5 // pred_check
        %p184 = pneg %p183
      $region22: #{tpu_custom_call.1} parent=5 // pred_check_branch
        %186 = sbr.rel (%p184) target = $region24
      $region23: #{tpu_custom_call.1} parent=5 // pred_region
        // Predicated region
        $region25: #{tpu_custom_call.1} parent=23 // pred_check
          %p187 = pneg %p57
        $region26: #{tpu_custom_call.1} parent=23 // pred_check_branch
          %189 = sbr.rel (%p187) target = $region28
        $region27: #{tpu_custom_call.1} parent=23 // pred_region
          %s190 = sand.u32 %s47, 1
          %s191 = scalar_lea.sflag [#allocation4], %s190
          %s192 = sand.u32 %s47, 1
          %s193 = smul.addr %s192, 8
          %s194 = scalar_lea.vmem [#allocation3], %s193
          %s196 = ssub.s32 128, 128
          %197 = vsyncadd %s191, %s196
          %s198 = sadd.s32 %s25, %s23
          %s199 = smul.addr %s198, 128
          %s200 = scalar_lea.hbm %s0, %s199
          %s202 = sshll.u32 %s194, 4
          %s203 = int_to_ptr.vmem [resolvable:$true] %s202
          %205 = dma.hbm_to_vmem [thread:$0]  %s200, 128, %s203, %s191
        $region28: #{tpu_custom_call.1} parent=23 // pred_fallthru
          _
      $region24: #{tpu_custom_call.1} parent=5 // pred_fallthru
        _
      %p206 = scmp.le.s32.totalorder 1, %s16
      %p207 = scmp.lt.s32.totalorder %s16, 3
      %p208 = pnand %p206, %p207
      %p209 = pneg %p208
      // Predicated region
      $region29: #{tpu_custom_call.1} parent=5 // pred_check
        _
      $region30: #{tpu_custom_call.1} parent=5 // pred_check_branch
        %211 = sbr.rel (%p208) target = $region32
      $region31: #{tpu_custom_call.1} parent=5 // pred_region
        %s212 = ssub.s32 %s16, 1
        %s213 = sand.u32 %s50, 1
        %s214 = scalar_lea.sflag [#allocation4], %s213
        %s215 = sand.u32 %s50, 1
        %s216 = smul.addr %s215, 8
        %s217 = scalar_lea.vmem [#allocation3], %s216
        // Predicated region
        $region33: #{tpu_custom_call.1} parent=31 // pred_check
          %p218 = pneg %p63
        $region34: #{tpu_custom_call.1} parent=31 // pred_check_branch
          %220 = sbr.rel (%p218) target = $region36
        $region35: #{tpu_custom_call.1} parent=31 // pred_region
          %221 = dma.done %s214, 128
        $region36: #{tpu_custom_call.1} parent=31 // pred_fallthru
          _
        // Predicated region
        $region37: #{tpu_custom_call.1} parent=31 // pred_check
          %p222 = pneg %p91
        $region38: #{tpu_custom_call.1} parent=31 // pred_check_branch
          %224 = sbr.rel (%p222) target = $region40
        $region39: #{tpu_custom_call.1} parent=31 // pred_region
          %225 = dma.done [#allocation7], 512
        $region40: #{tpu_custom_call.1} parent=31 // pred_fallthru
          _
        %s226 = sand.u32 %s50, 1
        %s227 = scalar_lea.sflag [#allocation4], %s226
        %s228 = sand.u32 %s50, 1
        %s229 = smul.addr %s228, 8
        %s230 = scalar_lea.vmem [#allocation3], %s229
        %p231 = pneg %p63
        %p232 = pneg %p60
        %p233 = pneg %p91
        %p234 = pneg %p88
        %p235 = scmp.lt.s32.totalorder %s27, 0
        %s236 = scalar_select %p235, %s27, 0
        %s237 = scalar_lea.vmem %s2, %s236
        %p238 = pneg %p117
        %p239 = pneg %p114
        %p240 = pneg %p145
        %p241 = pneg %p142
        %s242 = sand.u32 %s132, 1
        %s243 = scalar_lea.sflag [#allocation5], %s242
        %s244 = sand.u32 %s132, 1
        %s245 = smul.addr %s244, 8
        %s246 = scalar_lea.vmem [#allocation8], %s245
        %s247 = smul.u32 4, %s28
        %p248 = scmp.lt.s32.totalorder %s27, 0
        %s249 = scalar_select %p248, %s27, 0
        %s250 = scalar_lea.vmem %s2, %s249
        %p251 = scmp.eq.s32.totalorder %s28, 0
        // Predicated region
        $region41: #{tpu_custom_call.1} parent=31 // pred_check
          %p252 = pneg %p251
        $region42: #{tpu_custom_call.1} parent=31 // pred_check_branch
          %254 = sbr.rel (%p252) target = $region44
        $region43: #{tpu_custom_call.1} parent=31 // pred_region
          %v255 = vld [vmem:[%s250] sm:$0x1]
          %v257 = vlaneseq
          %v258 = vshrl.u32 %v257, 7
          %v259 = vsub.s32 0, %v258
          %v260 = vrot.slane %v255, %v259
          %vm262 = vcmask 523264
          %263 = vst.msk [vmem:[#allocation2] sm:$0xff] %vm262, %v260
        $region44: #{tpu_custom_call.1} parent=31 // pred_fallthru
          _
        %v264 = vld [vmem:[#allocation2] sm:$0xff]
        %v265 = vld [vmem:[%s217] sm:$0xff]
        %v266 = vld [vmem:[#allocation6] sm:$0xff]
        %v267 = vld [vmem:[#allocation6 + $0x8] sm:$0xff]
        %v268 = vld [vmem:[#allocation6 + $0x10] sm:$0xff]
        %v269 = vld [vmem:[#allocation6 + $0x18] sm:$0xff]
        %vm270 = vcmask 261120
        %v272 = vsel %vm270, %v265, 0
        %274 = vmatprep.subr.mxu0 0.0
        %275 = vmatpush1.msra.mxu0 %v266
        %276 = vmatprep.subr.mxu0 0.0
        %277 = vmatpush1.msra.mxu0 %v267
        %278 = vmatprep.subr.mxu0 0.0
        %279 = vmatpush1.msra.mxu0 %v268
        %280 = vmatprep.subr.mxu0 0.0
        %281 = vmatpush1.msra.mxu0 %v269
        %282 = vmatprep.subr.mxu0 0.0
        %283 = vmatpush1.msra.mxu0 0.0
        %284 = vmatprep.subr.mxu0 0.0
        %285 = vmatpush1.msra.mxu0 0.0
        %286 = vmatprep.subr.mxu0 0.0
        %287 = vmatpush1.msra.mxu0 0.0
        %288 = vmatprep.subr.mxu0 0.0
        %289 = vmatpush1.msra.mxu0 0.0
        %290 = vmatprep.subr.mxu0 0.0
        %291 = vmatpush1.msra.mxu0 0.0
        %292 = vmatprep.subr.mxu0 0.0
        %293 = vmatpush1.msra.mxu0 0.0
        %294 = vmatprep.subr.mxu0 0.0
        %295 = vmatpush1.msra.mxu0 0.0
        %296 = vmatprep.subr.mxu0 0.0
        %297 = vmatpush1.msra.mxu0 0.0
        %298 = vmatprep.subr.mxu0 0.0
        %299 = vmatpush1.msra.mxu0 0.0
        %300 = vmatprep.subr.mxu0 0.0
        %301 = vmatpush1.msra.mxu0 0.0
        %302 = vmatprep.subr.mxu0 0.0
        %303 = vmatpush1.msra.mxu0 0.0
        %304 = vmatprep.subr.mxu0 0.0
        %305 = vmatpush1.msra.mxu0 0.0
        %306 = vmatprep.subr.mxu0 0.0
        %307 = vmatpush1.msra.mxu0 0.0
        %308 = vmatprep.subr.mxu0 0.0
        %309 = vmatpush1.msra.mxu0 0.0
        %310 = vmatprep.subr.mxu0 0.0
        %311 = vmatpush1.msra.mxu0 0.0
        %312 = vmatprep.subr.mxu0 0.0
        %313 = vmatpush1.msra.mxu0 0.0
        %314 = vmatprep.subr.mxu0 0.0
        %315 = vmatpush1.msra.mxu0 0.0
        %316 = vmatprep.subr.mxu0 0.0
        %317 = vmatpush1.msra.mxu0 0.0
        %318 = vmatprep.subr.mxu0 0.0
        %319 = vmatpush1.msra.mxu0 0.0
        %320 = vmatprep.subr.mxu0 0.0
        %321 = vmatpush1.msra.mxu0 0.0
        %322 = vmatprep.subr.mxu0 0.0
        %323 = vmatpush1.msra.mxu0 0.0
        %324 = vmatprep.subr.mxu0 0.0
        %325 = vmatpush1.msra.mxu0 0.0
        %326 = vmatprep.subr.mxu0 0.0
        %327 = vmatpush1.msra.mxu0 0.0
        %328 = vmatprep.subr.mxu0 0.0
        %329 = vmatpush1.msra.mxu0 0.0
        %330 = vmatprep.subr.mxu0 0.0
        %331 = vmatpush1.msra.mxu0 0.0
        %332 = vmatprep.subr.mxu0 0.0
        %333 = vmatpush1.msra.mxu0 0.0
        %334 = vmatprep.subr.mxu0 0.0
        %335 = vmatpush1.msra.mxu0 0.0
        %336 = vmatprep.subr.mxu0 0.0
        %337 = vmatpush1.msra.mxu0 0.0
        %338 = vmatprep.mubr.f32.mxu0 0.0
        %339 = vmatmul.mubr.f32.gmra.mrb[0].mxu0 %v272
        %v340 = vpop.f32.mrb[0].mxu0
        %v341 = vadd.f32 0.0, %v340
        %v342 = vpop.f32.mrb[0].mxu0
        %343 = vdwg.mxu0
        %v344 = vadd.f32 %v264, %v341
        %vm345 = vcmask 523264
        %346 = vst.msk [vmem:[#allocation2] sm:$0xff] %vm345, %v344
        // Predicated region
        $region45: #{tpu_custom_call.1} parent=31 // pred_check
          %p347 = pneg %p251
        $region46: #{tpu_custom_call.1} parent=31 // pred_check_branch
          %349 = sbr.rel (%p347) target = $region48
        $region47: #{tpu_custom_call.1} parent=31 // pred_region
          %v350 = vld [vmem:[#allocation2] sm:$0xff]
          %351 = vst.msk [vmem:[%s246] sm:$0xff] %vm345, %v350
        $region48: #{tpu_custom_call.1} parent=31 // pred_fallthru
          _
        %s352 = sand.u32 %s132, 1
        %s353 = scalar_lea.sflag [#allocation5], %s352
        %s354 = sand.u32 %s132, 1
        %s355 = smul.addr %s354, 8
        %s356 = scalar_lea.vmem [#allocation8], %s355
        // Predicated region
        $region49: #{tpu_custom_call.1} parent=31 // pred_check
          %p357 = pneg %p142
        $region50: #{tpu_custom_call.1} parent=31 // pred_check_branch
          %359 = sbr.rel (%p357) target = $region52
        $region51: #{tpu_custom_call.1} parent=31 // pred_region
          %s361 = ssub.s32 128, 128
          %362 = vsyncadd %s353, %s361
          %s363 = sadd.s32 %s27, %s26
          %s364 = smul.addr %s363, 128
          %s365 = scalar_lea.hbm %s3, %s364
          %s367 = sshll.u32 %s356, 4
          %s368 = int_to_ptr.vmem [resolvable:$true] %s367
          %370 = dma.vmem_to_hbm [thread:$0]  %s368, 128, %s365, %s353
        $region52: #{tpu_custom_call.1} parent=31 // pred_fallthru
          _
      $region32: #{tpu_custom_call.1} parent=5 // pred_fallthru
        _
      %p371 = scmp.le.s32.totalorder 2, %s16
      // Predicated region
      $region53: #{tpu_custom_call.1} parent=5 // pred_check
        %p372 = pneg %p371
      $region54: #{tpu_custom_call.1} parent=5 // pred_check_branch
        %374 = sbr.rel (%p372) target = $region56
      $region55: #{tpu_custom_call.1} parent=5 // pred_region
        %s375 = ssub.s32 %s16, 2
        // Predicated region
        $region57: #{tpu_custom_call.1} parent=55 // pred_check
          %p376 = pneg %p148
        $region58: #{tpu_custom_call.1} parent=55 // pred_check_branch
          %378 = sbr.rel (%p376) target = $region60
        $region59: #{tpu_custom_call.1} parent=55 // pred_region
          %s379 = sand.u32 %s133, 1
          %s380 = scalar_lea.sflag [#allocation5], %s379
          %s381 = sand.u32 %s133, 1
          %s382 = smul.addr %s381, 8
          %s383 = scalar_lea.vmem [#allocation8], %s382
          %384 = dma.done %s380, 128
        $region60: #{tpu_custom_call.1} parent=55 // pred_fallthru
          _
      $region56: #{tpu_custom_call.1} parent=5 // pred_fallthru
        _
    $region6: #{tpu_custom_call.1} parent=1 // loop_footer
      %s20 = sadd.s32 1, %s16
    $region7: #{tpu_custom_call.1} parent=1 // loop_footer_branch
      %15 = sbr.rel target = $region3
    $region8: #{tpu_custom_call.1} parent=1 // loop_exit
      _
    %385 = vsyncpa [#allocation4], 1
    %s386 = scalar_lea.sflag [#allocation4], 1
    %387 = vsyncpa %s386, 1
    %388 = vsyncpa [#allocation7], 1
    %389 = vsyncpa [#allocation5], 1
    %s390 = scalar_lea.sflag [#allocation5], 1
    %391 = vsyncpa %s390, 1

</llo_original>
